<compile_context>
chip_gen: v7x
topology: tpu7x:2x2x1
jax: 0.10.0
libtpu: 0.0.40
codegen_flags: <defaults>
</compile_context>

<pallas_src>
import jax
import jax.numpy as jnp
from jax.experimental import pallas as pl
from jax.experimental.pallas import tpu as pltpu


def rff_kernel(d_ref, s_ref, wb_ref, wld_ref, wls_ref, bias_ref, out_ref):
    """One batch tile.

    d_ref:    (TB, D1)        dynamic features
    s_ref:    (TB, D2)        static features
    wb_ref:   (D2*D1, O)      flattened bilinear weight, Wb_flat[j*D1+i, o]
    wld_ref:  (D1, O)         linear weight acting on d
    wls_ref:  (D2, O)         linear weight acting on s
    bias_ref: (1, O)          b_bilinear + b_lin
    out_ref:  (TB, O)
    """
    d = d_ref[...].astype(jnp.float32)          # (TB, D1)
    s = s_ref[...].astype(jnp.float32)          # (TB, D2)
    tb = d.shape[0]
    d1 = d.shape[1]
    d2 = s.shape[1]

    # Bilinear features via a single broadcasted outer product:
    #   feats[b, j*D1 + i] = d[b, i] * s[b, j]
    feats = (s[:, :, None] * d[:, None, :]).reshape(tb, d2 * d1)

    acc = jnp.dot(feats, wb_ref[...], preferred_element_type=jnp.float32)
    acc = acc + jnp.dot(d, wld_ref[...], preferred_element_type=jnp.float32)
    acc = acc + jnp.dot(s, wls_ref[...], preferred_element_type=jnp.float32)
    acc = acc + bias_ref[...]
    out_ref[...] = jnp.tanh(acc).astype(out_ref.dtype)


def _round_up(x, m):
    return ((x + m - 1) // m) * m


def rff_forward(d, s, w_bilinear, b_bilinear, w_lin, b_lin, *, block_b=2048):
    """d: (B, D1), s: (B, D2); weights in PyTorch layout:
       w_bilinear: (O, D1, D2), b_bilinear: (O,),
       w_lin: (O, D1 + D2),     b_lin: (O,)."""
    B, D1 = d.shape
    _, D2 = s.shape
    O = w_bilinear.shape[0]

    # ---- static weight plumbing (plain JAX, folded at trace time) ----
    # Wb_flat[j*D1 + i, o] = Wb[o, i, j]  -> matches in-kernel feature order.
    wb_flat = jnp.transpose(w_bilinear, (2, 1, 0)).reshape(D2 * D1, O)
    wl_d = jnp.transpose(w_lin[:, :D1])                 # (D1, O)
    wl_s = jnp.transpose(w_lin[:, D1:])                 # (D2, O)
    bias = (b_bilinear + b_lin).reshape(1, O)

    # ---- batch tiling: pad B up to a multiple of the tile, never fall back
    # to a whole-batch block (VMEM hazard on v7x's 64 MiB). ----
    if B <= 1024:
        tb = max(8, _round_up(B, 8))
    else:
        # >= 2 grid steps so both TensorCores are fed on v7x, capped at block_b.
        tb = min(block_b, _round_up(pl.cdiv(B, 2), 8))
    B_pad = _round_up(B, tb)

    if B_pad != B:
        pad = B_pad - B
        d_p = jnp.pad(d, ((0, pad), (0, 0)))
        s_p = jnp.pad(s, ((0, pad), (0, 0)))
    else:
        d_p, s_p = d, s

    grid = (B_pad // tb,)

    out = pl.pallas_call(
        rff_kernel,
        out_shape=jax.ShapeDtypeStruct((B_pad, O), d.dtype),
        grid=grid,
        in_specs=[
            pl.BlockSpec((tb, D1), lambda i: (i, 0)),        # d    : streamed over B
            pl.BlockSpec((tb, D2), lambda i: (i, 0)),        # s    : streamed over B
            pl.BlockSpec((D2 * D1, O), lambda i: (0, 0)),    # Wb   : resident
            pl.BlockSpec((D1, O), lambda i: (0, 0)),         # Wl_d : resident
            pl.BlockSpec((D2, O), lambda i: (0, 0)),         # Wl_s : resident
            pl.BlockSpec((1, O), lambda i: (0, 0)),          # bias : resident
        ],
        out_specs=pl.BlockSpec((tb, O), lambda i: (i, 0)),
        compiler_params=pltpu.CompilerParams(
            dimension_semantics=("parallel",)),
    )(d_p, s_p, wb_flat, wl_d, wl_s, bias)

    return out[:B] if B_pad != B else out


def rff_reference(d, s, w_bilinear, b_bilinear, w_lin, b_lin):
    bil = jnp.einsum('bi,oij,bj->bo', d, w_bilinear, s) + b_bilinear
    cat = jnp.concatenate([d, s], axis=-1)
    lin = cat @ w_lin.T + b_lin
    return jnp.tanh(bil + lin)


if __name__ == "__main__":
    D_DYN, D_STAT, OUT = 16, 8, 32

    key = jax.random.PRNGKey(0)
    k_d, k_s, k_wb, k_bb, k_wl, k_bl, k_d2, k_s2 = jax.random.split(key, 8)

    # Deterministic synthetic parameters (shapes match nn.Bilinear / nn.Linear).
    w_bilinear = 0.1 * jax.random.normal(k_wb, (OUT, D_DYN, D_STAT), jnp.float32)
    b_bilinear = 0.1 * jax.random.normal(k_bb, (OUT,), jnp.float32)
    w_lin = 0.1 * jax.random.normal(k_wl, (OUT, D_DYN + D_STAT), jnp.float32)
    b_lin = 0.1 * jax.random.normal(k_bl, (OUT,), jnp.float32)

    # --- small batch (single tile) ---
    B1 = 8
    d1 = jax.random.normal(k_d, (B1, D_DYN), jnp.float32)
    s1 = jax.random.normal(k_s, (B1, D_STAT), jnp.float32)
    out1 = jax.block_until_ready(
        rff_forward(d1, s1, w_bilinear, b_bilinear, w_lin, b_lin))
    ref1 = rff_reference(d1, s1, w_bilinear, b_bilinear, w_lin, b_lin)
    assert out1.shape == (B1, OUT)
    assert jnp.allclose(out1, ref1, atol=2e-5, rtol=2e-5), "mismatch (B=8)"

    # --- larger, non-divisible batch (exercises padding + 2-step grid) ---
    B2 = 2600
    d2 = jax.random.normal(k_d2, (B2, D_DYN), jnp.float32)
    s2 = jax.random.normal(k_s2, (B2, D_STAT), jnp.float32)
    out2 = jax.block_until_ready(
        rff_forward(d2, s2, w_bilinear, b_bilinear, w_lin, b_lin))
    ref2 = rff_reference(d2, s2, w_bilinear, b_bilinear, w_lin, b_lin)
    assert out2.shape == (B2, OUT)
    assert jnp.allclose(out2, ref2, atol=2e-5, rtol=2e-5), "mismatch (B=2600)"

    print("KERNEL_OK")
</pallas_src>

<mosaic_0001>
module attributes {stable_mosaic.version = 11 : i64} {
  func.func @rff_kernel(%arg0: i32, %arg1: memref<8x16xf32, #tpu.memory_space<vmem>>, %arg2: memref<8x8xf32, #tpu.memory_space<vmem>>, %arg3: memref<128x32xf32, #tpu.memory_space<vmem>>, %arg4: memref<16x32xf32, #tpu.memory_space<vmem>>, %arg5: memref<8x32xf32, #tpu.memory_space<vmem>>, %arg6: memref<1x32xf32, #tpu.memory_space<vmem>>, %arg7: memref<8x32xf32, #tpu.memory_space<vmem>>) attributes {dimension_semantics = [#tpu.dimension_semantics<parallel>], iteration_bounds = array<i64: 1>, scalar_prefetch = 0 : i64, scratch_operands = 0 : i64, tpu.core_type = #tpu.core_type<tc>, window_params = [{transform_indices = @transform_0, window_bounds = array<i64: 8, 16>}, {transform_indices = @transform_1, window_bounds = array<i64: 8, 8>}, {pipeline_mode = #tpu.pipeline_mode<synchronous>, transform_indices = @transform_2, window_bounds = array<i64: 128, 32>}, {pipeline_mode = #tpu.pipeline_mode<synchronous>, transform_indices = @transform_3, window_bounds = array<i64: 16, 32>}, {pipeline_mode = #tpu.pipeline_mode<synchronous>, transform_indices = @transform_4, window_bounds = array<i64: 8, 32>}, {pipeline_mode = #tpu.pipeline_mode<synchronous>, transform_indices = @transform_5, window_bounds = array<i64: 1, 32>}, {transform_indices = @transform_6, window_bounds = array<i64: 8, 32>}]} {
    %c0 = arith.constant 0 : index
    %c0_0 = arith.constant 0 : index
    %0 = vector.load %arg1[%c0, %c0_0] : memref<8x16xf32, #tpu.memory_space<vmem>>, vector<8x16xf32>
    %c0_1 = arith.constant 0 : index
    %c0_2 = arith.constant 0 : index
    %1 = vector.load %arg2[%c0_1, %c0_2] : memref<8x8xf32, #tpu.memory_space<vmem>>, vector<8x8xf32>
    %2 = vector.shape_cast %1 : vector<8x8xf32> to vector<8x8x1xf32>
    %3 = vector.shape_cast %0 : vector<8x16xf32> to vector<8x1x16xf32>
    %4 = vector.broadcast %2 : vector<8x8x1xf32> to vector<8x8x16xf32>
    %5 = vector.broadcast %3 : vector<8x1x16xf32> to vector<8x8x16xf32>
    %6 = arith.mulf %4, %5 : vector<8x8x16xf32>
    %7 = vector.shape_cast %6 : vector<8x8x16xf32> to vector<8x128xf32>
    %c0_3 = arith.constant 0 : index
    %c0_4 = arith.constant 0 : index
    %8 = vector.load %arg3[%c0_3, %c0_4] : memref<128x32xf32, #tpu.memory_space<vmem>>, vector<128x32xf32>
    %cst = arith.constant dense<0.000000e+00> : vector<8x32xf32>
    %9 = tpu.matmul %7, %8, %cst {dimension_numbers = #tpu.dot_dimension_numbers<[1], [0], [0], [1], [0, 0, 1, 1], [], []>} : vector<8x128xf32>, vector<128x32xf32>, vector<8x32xf32> -> vector<8x32xf32>
    %c0_5 = arith.constant 0 : index
    %c0_6 = arith.constant 0 : index
    %10 = vector.load %arg4[%c0_5, %c0_6] : memref<16x32xf32, #tpu.memory_space<vmem>>, vector<16x32xf32>
    %cst_7 = arith.constant dense<0.000000e+00> : vector<8x32xf32>
    %11 = tpu.matmul %0, %10, %cst_7 {dimension_numbers = #tpu.dot_dimension_numbers<[1], [0], [0], [1], [0, 0, 1, 1], [], []>} : vector<8x16xf32>, vector<16x32xf32>, vector<8x32xf32> -> vector<8x32xf32>
    %12 = arith.addf %9, %11 : vector<8x32xf32>
    %c0_8 = arith.constant 0 : index
    %c0_9 = arith.constant 0 : index
    %13 = vector.load %arg5[%c0_8, %c0_9] : memref<8x32xf32, #tpu.memory_space<vmem>>, vector<8x32xf32>
    %cst_10 = arith.constant dense<0.000000e+00> : vector<8x32xf32>
    %14 = tpu.matmul %1, %13, %cst_10 {dimension_numbers = #tpu.dot_dimension_numbers<[1], [0], [0], [1], [0, 0, 1, 1], [], []>} : vector<8x8xf32>, vector<8x32xf32>, vector<8x32xf32> -> vector<8x32xf32>
    %15 = arith.addf %12, %14 : vector<8x32xf32>
    %c0_11 = arith.constant 0 : index
    %c0_12 = arith.constant 0 : index
    %16 = vector.load %arg6[%c0_11, %c0_12] : memref<1x32xf32, #tpu.memory_space<vmem>>, vector<1x32xf32>
    %17 = vector.broadcast %16 : vector<1x32xf32> to vector<8x32xf32>
    %18 = arith.addf %15, %17 : vector<8x32xf32>
    %19 = math.tanh %18 : vector<8x32xf32>
    %c0_13 = arith.constant 0 : index
    %c0_14 = arith.constant 0 : index
    %20 = vector.load %arg7[%c0_13, %c0_14] : memref<8x32xf32, #tpu.memory_space<vmem>>, vector<8x32xf32>
    tpu.vector_store %arg7[%c0_13, %c0_14], %19 {strides = array<i32>} : memref<8x32xf32, #tpu.memory_space<vmem>>, vector<8x32xf32>,
    return
  }
  func.func @transform_0(%arg0: i32) -> (i32, i32) {
    %c0_i32 = arith.constant 0 : i32
    %c0_i32_0 = arith.constant 0 : i32
    return %arg0, %c0_i32 : i32, i32
  }
  func.func @transform_1(%arg0: i32) -> (i32, i32) {
    %c0_i32 = arith.constant 0 : i32
    %c0_i32_0 = arith.constant 0 : i32
    return %arg0, %c0_i32 : i32, i32
  }
  func.func @transform_2(%arg0: i32) -> (i32, i32) {
    %c0_i32 = arith.constant 0 : i32
    %c0_i32_0 = arith.constant 0 : i32
    %c0_i32_1 = arith.constant 0 : i32
    return %c0_i32, %c0_i32_0 : i32, i32
  }
  func.func @transform_3(%arg0: i32) -> (i32, i32) {
    %c0_i32 = arith.constant 0 : i32
    %c0_i32_0 = arith.constant 0 : i32
    %c0_i32_1 = arith.constant 0 : i32
    return %c0_i32, %c0_i32_0 : i32, i32
  }
  func.func @transform_4(%arg0: i32) -> (i32, i32) {
    %c0_i32 = arith.constant 0 : i32
    %c0_i32_0 = arith.constant 0 : i32
    %c0_i32_1 = arith.constant 0 : i32
    return %c0_i32, %c0_i32_0 : i32, i32
  }
  func.func @transform_5(%arg0: i32) -> (i32, i32) {
    %c0_i32 = arith.constant 0 : i32
    %c0_i32_0 = arith.constant 0 : i32
    %c0_i32_1 = arith.constant 0 : i32
    return %c0_i32, %c0_i32_0 : i32, i32
  }
  func.func @transform_6(%arg0: i32) -> (i32, i32) {
    %c0_i32 = arith.constant 0 : i32
    %c0_i32_0 = arith.constant 0 : i32
    return %arg0, %c0_i32 : i32, i32
  }
}

</mosaic_0001>

<llo_original>
// kernel: tpu_custom_call.1
$region0: #{tpu_custom_call.1}
  #allocation0 [shape = 'u32[]', space=smem, size = 0x4, offset = 0x4, fixed_abs, tag = 'smem constant byte address 0x4 - core index']
  #allocation1 [shape = 'u32[144,128]{1,0:T(1,128)}', space=vmem, size = 0x12000, scoped, tag = 'internal scratch']
  %s0 = inlined_call_operand.vmem [shape: f32[8,16], index: 0, kind: input, shape index: {}]
  %s1 = inlined_call_operand.vmem [shape: f32[8,8], index: 1, kind: input, shape index: {}]
  %s2 = inlined_call_operand.vmem [shape: f32[128,32], index: 2, kind: input, shape index: {}]
  %s3 = inlined_call_operand.vmem [shape: f32[16,32], index: 3, kind: input, shape index: {}]
  %s4 = inlined_call_operand.vmem [shape: f32[8,32], index: 4, kind: input, shape index: {}]
  %s5 = inlined_call_operand.vmem [shape: f32[1,32], index: 5, kind: input, shape index: {}]
  %s6 = inlined_call_operand.hbm [shape: f32[8,32], index: 6, kind: output, shape index: {}]
  %s7 = sld [smem:[#allocation0]]
  $region34: #{tpu_custom_call.1} parent=0
    _
  %s9 = ssub.s32 1, %s7
  %s10 = scalar_select 0, %s9, %s7
  $region1: #{tpu_custom_call.1} parent=0
    #allocation2 [shape = 'u8[4096]{0}', space=vmem, size = 0x1000, scoped, tag = 'output window, operand 0, single buffered']
    #allocation3 [shape = 's32[1]{0}', space=sflag, size = 0x4, scoped, tag = 'scoped memory for tpu_custom_call.1']
    %11 = vsyncpa [#allocation3], 0
    // Predicated region
    $region2: #{tpu_custom_call.1} parent=1 // pred_check
      _
    $region3: #{tpu_custom_call.1} parent=1 // pred_check_branch
      %13 = sbr.rel (0) target = $region5
    $region4: #{tpu_custom_call.1} parent=1 // pred_region
      _
    $region5: #{tpu_custom_call.1} parent=1 // pred_fallthru
      _
    // Predicated region
    $region6: #{tpu_custom_call.1} parent=1 // pred_check
      _
    $region7: #{tpu_custom_call.1} parent=1 // pred_check_branch
      %15 = sbr.rel (0) target = $region9
    $region8: #{tpu_custom_call.1} parent=1 // pred_region
      _
    $region9: #{tpu_custom_call.1} parent=1 // pred_fallthru
      _
    // Predicated region
    $region10: #{tpu_custom_call.1} parent=1 // pred_check
      _
    $region11: #{tpu_custom_call.1} parent=1 // pred_check_branch
      %17 = sbr.rel (0) target = $region13
    $region12: #{tpu_custom_call.1} parent=1 // pred_region
      _
    $region13: #{tpu_custom_call.1} parent=1 // pred_fallthru
      _
    // Predicated region
    $region14: #{tpu_custom_call.1} parent=1 // pred_check
      _
    $region15: #{tpu_custom_call.1} parent=1 // pred_check_branch
      %19 = sbr.rel (0) target = $region17
    $region16: #{tpu_custom_call.1} parent=1 // pred_region
      _
    $region17: #{tpu_custom_call.1} parent=1 // pred_fallthru
      _
    // Predicated region
    $region18: #{tpu_custom_call.1} parent=1 // pred_check
      _
    $region19: #{tpu_custom_call.1} parent=1 // pred_check_branch
      %21 = sbr.rel (0) target = $region21
    $region20: #{tpu_custom_call.1} parent=1 // pred_region
      _
    $region21: #{tpu_custom_call.1} parent=1 // pred_fallthru
      _
    // Predicated region
    $region22: #{tpu_custom_call.1} parent=1 // pred_check
      _
    $region23: #{tpu_custom_call.1} parent=1 // pred_check_branch
      %23 = sbr.rel (0) target = $region25
    $region24: #{tpu_custom_call.1} parent=1 // pred_region
      _
    $region25: #{tpu_custom_call.1} parent=1 // pred_fallthru
      _
    %v24 = vld [vmem:[%s0] sm:$0xff]
    %v25 = vld [vmem:[%s1] sm:$0xff]
    %v26 = vlaneseq
    %v27 = vshrl.u32 %v26, 7
    %v28 = vsub.s32 0, %v27
    %v29 = vrot.slane %v25, %v28
    %31 = vbcast.lane.b32.xlu0 %v29, 256
    %v32 = vpop.permute.xlu0 %31
    %v33 = vlaneseq
    %v34 = vshrl.u32 %v33, 7
    %v35 = vsub.s32 1, %v34
    %v36 = vrot.slane %v25, %v35
    %38 = vbcast.lane.b32.xlu0 %v36, 256
    %v39 = vpop.permute.xlu0 %38
    %v40 = vlaneseq
    %v41 = vshrl.u32 %v40, 7
    %v42 = vsub.s32 2, %v41
    %v43 = vrot.slane %v25, %v42
    %45 = vbcast.lane.b32.xlu0 %v43, 256
    %v46 = vpop.permute.xlu0 %45
    %v47 = vlaneseq
    %v48 = vshrl.u32 %v47, 7
    %v49 = vsub.s32 3, %v48
    %v50 = vrot.slane %v25, %v49
    %52 = vbcast.lane.b32.xlu0 %v50, 256
    %v53 = vpop.permute.xlu0 %52
    %v54 = vlaneseq
    %v55 = vshrl.u32 %v54, 7
    %v56 = vsub.s32 4, %v55
    %v57 = vrot.slane %v25, %v56
    %59 = vbcast.lane.b32.xlu0 %v57, 256
    %v60 = vpop.permute.xlu0 %59
    %v61 = vlaneseq
    %v62 = vshrl.u32 %v61, 7
    %v63 = vsub.s32 5, %v62
    %v64 = vrot.slane %v25, %v63
    %66 = vbcast.lane.b32.xlu0 %v64, 256
    %v67 = vpop.permute.xlu0 %66
    %v68 = vlaneseq
    %v69 = vshrl.u32 %v68, 7
    %v70 = vsub.s32 6, %v69
    %v71 = vrot.slane %v25, %v70
    %73 = vbcast.lane.b32.xlu0 %v71, 256
    %v74 = vpop.permute.xlu0 %73
    %v75 = vlaneseq
    %v76 = vshrl.u32 %v75, 7
    %v77 = vsub.s32 7, %v76
    %v78 = vrot.slane %v25, %v77
    %80 = vbcast.lane.b32.xlu0 %v78, 256
    %v81 = vpop.permute.xlu0 %80
    %v83 = vcombine.high %v24, %v24
    %v85 = vunpack.c.l.s4 1966171168
    %v86 = vunpack.c.0.s8 %v85
    %v87 = vlaneseq
    %v88 = vshrl.u32 %v87, 7
    %v89 = vsub.s32 %v86, %v88
    %v90 = vrot.slane %v24, %v89
    %v92 = vunpack.c.l.s4 1966171168
    %v93 = vunpack.c.0.s8 %v92
    %v94 = vlaneseq
    %v95 = vshrl.u32 %v94, 7
    %v96 = vsub.s32 %v93, %v95
    %v97 = vrot.slane %v83, %v96
    %v98 = vcombine.high %v90, %v90
    %v99 = vcombine.high %v97, %v97
    %v101 = vunpack.c.l.s4 1966171168
    %v102 = vunpack.c.0.s8 %v101
    %v103 = vlaneseq
    %v104 = vshrl.u32 %v103, 7
    %v105 = vsub.s32 %v102, %v104
    %v106 = vrot.slane %v90, %v105
    %v108 = vunpack.c.l.s4 1966171168
    %v109 = vunpack.c.0.s8 %v108
    %v110 = vlaneseq
    %v111 = vshrl.u32 %v110, 7
    %v112 = vsub.s32 %v109, %v111
    %v113 = vrot.slane %v97, %v112
    %v115 = vunpack.c.l.s4 1966171168
    %v116 = vunpack.c.0.s8 %v115
    %v117 = vlaneseq
    %v118 = vshrl.u32 %v117, 7
    %v119 = vsub.s32 %v116, %v118
    %v120 = vrot.slane %v98, %v119
    %v122 = vunpack.c.l.s4 1966171168
    %v123 = vunpack.c.0.s8 %v122
    %v124 = vlaneseq
    %v125 = vshrl.u32 %v124, 7
    %v126 = vsub.s32 %v123, %v125
    %v127 = vrot.slane %v99, %v126
    %v128 = vcombine.high %v106, %v106
    %v129 = vcombine.high %v113, %v113
    %v130 = vcombine.high %v120, %v120
    %v131 = vcombine.high %v127, %v127
    %v132 = vlaneseq
    %v133 = vshrl.u32 %v132, 7
    %v134 = vsub.s32 0, %v133
    %v135 = vrot.slane %v106, %v134
    %v136 = vlaneseq
    %v137 = vshrl.u32 %v136, 7
    %v138 = vsub.s32 0, %v137
    %v139 = vrot.slane %v120, %v138
    %v140 = vlaneseq
    %v141 = vshrl.u32 %v140, 7
    %v142 = vsub.s32 0, %v141
    %v143 = vrot.slane %v128, %v142
    %v144 = vlaneseq
    %v145 = vshrl.u32 %v144, 7
    %v146 = vsub.s32 0, %v145
    %v147 = vrot.slane %v130, %v146
    %v148 = vlaneseq
    %v149 = vshrl.u32 %v148, 7
    %v150 = vsub.s32 0, %v149
    %v151 = vrot.slane %v113, %v150
    %v152 = vlaneseq
    %v153 = vshrl.u32 %v152, 7
    %v154 = vsub.s32 0, %v153
    %v155 = vrot.slane %v127, %v154
    %v156 = vlaneseq
    %v157 = vshrl.u32 %v156, 7
    %v158 = vsub.s32 0, %v157
    %v159 = vrot.slane %v129, %v158
    %v160 = vlaneseq
    %v161 = vshrl.u32 %v160, 7
    %v162 = vsub.s32 0, %v161
    %v163 = vrot.slane %v131, %v162
    %v172 = vmul.f32 %v32, %v135
    %v173 = vmul.f32 %v39, %v139
    %v174 = vmul.f32 %v46, %v143
    %v175 = vmul.f32 %v53, %v147
    %v176 = vmul.f32 %v60, %v151
    %v177 = vmul.f32 %v67, %v155
    %v178 = vmul.f32 %v74, %v159
    %v179 = vmul.f32 %v81, %v163
    %v180 = vcombine.low %v172, %v174
    %v181 = vcombine.high %v172, %v174
    %v183 = vunpack.c.l.s4 1983009808
    %v184 = vunpack.c.0.s8 %v183
    %v185 = vlaneseq
    %v186 = vshrl.u32 %v185, 7
    %v187 = vsub.s32 %v184, %v186
    %v188 = vrot.slane %v180, %v187
    %v190 = vunpack.c.l.s4 1983009808
    %v191 = vunpack.c.0.s8 %v190
    %v192 = vlaneseq
    %v193 = vshrl.u32 %v192, 7
    %v194 = vsub.s32 %v191, %v193
    %v195 = vrot.slane %v181, %v194
    %v196 = vcombine.low %v173, %v175
    %v197 = vcombine.high %v173, %v175
    %v199 = vunpack.c.l.s4 1983009808
    %v200 = vunpack.c.0.s8 %v199
    %v201 = vlaneseq
    %v202 = vshrl.u32 %v201, 7
    %v203 = vsub.s32 %v200, %v202
    %v204 = vrot.slane %v196, %v203
    %v206 = vunpack.c.l.s4 1983009808
    %v207 = vunpack.c.0.s8 %v206
    %v208 = vlaneseq
    %v209 = vshrl.u32 %v208, 7
    %v210 = vsub.s32 %v207, %v209
    %v211 = vrot.slane %v197, %v210
    %v212 = vcombine.low %v176, %v178
    %v213 = vcombine.high %v176, %v178
    %v215 = vunpack.c.l.s4 1983009808
    %v216 = vunpack.c.0.s8 %v215
    %v217 = vlaneseq
    %v218 = vshrl.u32 %v217, 7
    %v219 = vsub.s32 %v216, %v218
    %v220 = vrot.slane %v212, %v219
    %v222 = vunpack.c.l.s4 1983009808
    %v223 = vunpack.c.0.s8 %v222
    %v224 = vlaneseq
    %v225 = vshrl.u32 %v224, 7
    %v226 = vsub.s32 %v223, %v225
    %v227 = vrot.slane %v213, %v226
    %v228 = vcombine.low %v177, %v179
    %v229 = vcombine.high %v177, %v179
    %v231 = vunpack.c.l.s4 1983009808
    %v232 = vunpack.c.0.s8 %v231
    %v233 = vlaneseq
    %v234 = vshrl.u32 %v233, 7
    %v235 = vsub.s32 %v232, %v234
    %v236 = vrot.slane %v228, %v235
    %v238 = vunpack.c.l.s4 1983009808
    %v239 = vunpack.c.0.s8 %v238
    %v240 = vlaneseq
    %v241 = vshrl.u32 %v240, 7
    %v242 = vsub.s32 %v239, %v241
    %v243 = vrot.slane %v229, %v242
    %v244 = vcombine.low %v188, %v204
    %v245 = vcombine.high %v188, %v204
    %v247 = vunpack.c.l.s4 1934713408
    %v248 = vunpack.c.0.s8 %v247
    %v249 = vlaneseq
    %v250 = vshrl.u32 %v249, 7
    %v251 = vsub.s32 %v248, %v250
    %v252 = vrot.slane %v244, %v251
    %v254 = vunpack.c.l.s4 1934713408
    %v255 = vunpack.c.0.s8 %v254
    %v256 = vlaneseq
    %v257 = vshrl.u32 %v256, 7
    %v258 = vsub.s32 %v255, %v257
    %v259 = vrot.slane %v245, %v258
    %v260 = vcombine.low %v195, %v211
    %v261 = vcombine.high %v195, %v211
    %v263 = vunpack.c.l.s4 1934713408
    %v264 = vunpack.c.0.s8 %v263
    %v265 = vlaneseq
    %v266 = vshrl.u32 %v265, 7
    %v267 = vsub.s32 %v264, %v266
    %v268 = vrot.slane %v260, %v267
    %v270 = vunpack.c.l.s4 1934713408
    %v271 = vunpack.c.0.s8 %v270
    %v272 = vlaneseq
    %v273 = vshrl.u32 %v272, 7
    %v274 = vsub.s32 %v271, %v273
    %v275 = vrot.slane %v261, %v274
    %v276 = vcombine.low %v220, %v236
    %v277 = vcombine.high %v220, %v236
    %v279 = vunpack.c.l.s4 1934713408
    %v280 = vunpack.c.0.s8 %v279
    %v281 = vlaneseq
    %v282 = vshrl.u32 %v281, 7
    %v283 = vsub.s32 %v280, %v282
    %v284 = vrot.slane %v276, %v283
    %v286 = vunpack.c.l.s4 1934713408
    %v287 = vunpack.c.0.s8 %v286
    %v288 = vlaneseq
    %v289 = vshrl.u32 %v288, 7
    %v290 = vsub.s32 %v287, %v289
    %v291 = vrot.slane %v277, %v290
    %v292 = vcombine.low %v227, %v243
    %v293 = vcombine.high %v227, %v243
    %v295 = vunpack.c.l.s4 1934713408
    %v296 = vunpack.c.0.s8 %v295
    %v297 = vlaneseq
    %v298 = vshrl.u32 %v297, 7
    %v299 = vsub.s32 %v296, %v298
    %v300 = vrot.slane %v292, %v299
    %v302 = vunpack.c.l.s4 1934713408
    %v303 = vunpack.c.0.s8 %v302
    %v304 = vlaneseq
    %v305 = vshrl.u32 %v304, 7
    %v306 = vsub.s32 %v303, %v305
    %v307 = vrot.slane %v293, %v306
    %v308 = vcombine.low %v252, %v284
    %v309 = vcombine.high %v252, %v284
    %v310 = vcombine.low %v259, %v291
    %v311 = vcombine.high %v259, %v291
    %v312 = vcombine.low %v268, %v300
    %v313 = vcombine.high %v268, %v300
    %v314 = vcombine.low %v275, %v307
    %v315 = vcombine.high %v275, %v307
    %317 = vrot.lane.b32.xlu0 %v309, 16
    %v318 = vpop.permute.xlu0 %317
    %321 = vrot.lane.b32.xlu0 %v310, 32
    %v322 = vpop.permute.xlu0 %321
    %325 = vrot.lane.b32.xlu0 %v311, 48
    %v326 = vpop.permute.xlu0 %325
    %329 = vrot.lane.b32.xlu0 %v312, 64
    %v330 = vpop.permute.xlu0 %329
    %333 = vrot.lane.b32.xlu0 %v313, 80
    %v334 = vpop.permute.xlu0 %333
    %337 = vrot.lane.b32.xlu0 %v314, 96
    %v338 = vpop.permute.xlu0 %337
    %341 = vrot.lane.b32.xlu0 %v315, 112
    %v342 = vpop.permute.xlu0 %341
    %vm344 = vcmask 130048
    %v345 = vsel %vm344, %v308, %v318
    %vm346 = vcmask 261120
    %v347 = vsel %vm346, %v345, %v322
    %vm348 = vcmask 392192
    %v349 = vsel %vm348, %v347, %v326
    %vm350 = vcmask 523264
    %v351 = vsel %vm350, %v349, %v330
    %vm352 = vcmask 654336
    %v353 = vsel %vm352, %v351, %v334
    %vm354 = vcmask 785408
    %v355 = vsel %vm354, %v353, %v338
    %vm356 = vcmask 916480
    %v357 = vsel %vm356, %v355, %v342
    %v358 = vld [vmem:[%s2] sm:$0xff]
    %v359 = vld [vmem:[%s2 + $0x8] sm:$0xff]
    %v360 = vld [vmem:[%s2 + $0x10] sm:$0xff]
    %v361 = vld [vmem:[%s2 + $0x18] sm:$0xff]
    %v362 = vld [vmem:[%s2 + $0x20] sm:$0xff]
    %v363 = vld [vmem:[%s2 + $0x28] sm:$0xff]
    %v364 = vld [vmem:[%s2 + $0x30] sm:$0xff]
    %v365 = vld [vmem:[%s2 + $0x38] sm:$0xff]
    %v366 = vld [vmem:[%s2 + $0x40] sm:$0xff]
    %v367 = vld [vmem:[%s2 + $0x48] sm:$0xff]
    %v368 = vld [vmem:[%s2 + $0x50] sm:$0xff]
    %v369 = vld [vmem:[%s2 + $0x58] sm:$0xff]
    %v370 = vld [vmem:[%s2 + $0x60] sm:$0xff]
    %v371 = vld [vmem:[%s2 + $0x68] sm:$0xff]
    %v372 = vld [vmem:[%s2 + $0x70] sm:$0xff]
    %v373 = vld [vmem:[%s2 + $0x78] sm:$0xff]
    %v374 = vld [vmem:[%s3] sm:$0xff]
    %v375 = vld [vmem:[%s3 + $0x8] sm:$0xff]
    %v376 = vsel %vm344, %v24, 0
    %378 = vmatprep.subr.mxu0 0.0
    %379 = vmatpush1.msra.mxu0 %v374
    %380 = vmatprep.subr.mxu0 0.0
    %381 = vmatpush1.msra.mxu0 %v375
    %382 = vmatprep.subr.mxu0 0.0
    %383 = vmatpush1.msra.mxu0 0.0
    %384 = vmatprep.subr.mxu0 0.0
    %385 = vmatpush1.msra.mxu0 0.0
    %386 = vmatprep.subr.mxu0 0.0
    %387 = vmatpush1.msra.mxu0 0.0
    %388 = vmatprep.subr.mxu0 0.0
    %389 = vmatpush1.msra.mxu0 0.0
    %390 = vmatprep.subr.mxu0 0.0
    %391 = vmatpush1.msra.mxu0 0.0
    %392 = vmatprep.subr.mxu0 0.0
    %393 = vmatpush1.msra.mxu0 0.0
    %394 = vmatprep.subr.mxu0 0.0
    %395 = vmatpush1.msra.mxu0 0.0
    %396 = vmatprep.subr.mxu0 0.0
    %397 = vmatpush1.msra.mxu0 0.0
    %398 = vmatprep.subr.mxu0 0.0
    %399 = vmatpush1.msra.mxu0 0.0
    %400 = vmatprep.subr.mxu0 0.0
    %401 = vmatpush1.msra.mxu0 0.0
    %402 = vmatprep.subr.mxu0 0.0
    %403 = vmatpush1.msra.mxu0 0.0
    %404 = vmatprep.subr.mxu0 0.0
    %405 = vmatpush1.msra.mxu0 0.0
    %406 = vmatprep.subr.mxu0 0.0
    %407 = vmatpush1.msra.mxu0 0.0
    %408 = vmatprep.subr.mxu0 0.0
    %409 = vmatpush1.msra.mxu0 0.0
    %410 = vmatprep.subr.mxu0 0.0
    %411 = vmatpush1.msra.mxu0 0.0
    %412 = vmatprep.subr.mxu0 0.0
    %413 = vmatpush1.msra.mxu0 0.0
    %414 = vmatprep.subr.mxu0 0.0
    %415 = vmatpush1.msra.mxu0 0.0
    %416 = vmatprep.subr.mxu0 0.0
    %417 = vmatpush1.msra.mxu0 0.0
    %418 = vmatprep.subr.mxu0 0.0
    %419 = vmatpush1.msra.mxu0 0.0
    %420 = vmatprep.subr.mxu0 0.0
    %421 = vmatpush1.msra.mxu0 0.0
    %422 = vmatprep.subr.mxu0 0.0
    %423 = vmatpush1.msra.mxu0 0.0
    %424 = vmatprep.subr.mxu0 0.0
    %425 = vmatpush1.msra.mxu0 0.0
    %426 = vmatprep.subr.mxu0 0.0
    %427 = vmatpush1.msra.mxu0 0.0
    %428 = vmatprep.subr.mxu0 0.0
    %429 = vmatpush1.msra.mxu0 0.0
    %430 = vmatprep.subr.mxu0 0.0
    %431 = vmatpush1.msra.mxu0 0.0
    %432 = vmatprep.subr.mxu0 0.0
    %433 = vmatpush1.msra.mxu0 0.0
    %434 = vmatprep.subr.mxu0 0.0
    %435 = vmatpush1.msra.mxu0 0.0
    %436 = vmatprep.subr.mxu0 0.0
    %437 = vmatpush1.msra.mxu0 0.0
    %438 = vmatprep.subr.mxu0 0.0
    %439 = vmatpush1.msra.mxu0 0.0
    %440 = vmatprep.subr.mxu0 0.0
    %441 = vmatpush1.msra.mxu0 0.0
    %442 = vmatprep.mubr.f32.mxu0 0.0
    %443 = vmatmul.mubr.f32.gmra.mrb[0].mxu0 %v376
    %v444 = vpop.f32.mrb[0].mxu0
    %v445 = vadd.f32 0.0, %v444
    %v446 = vpop.f32.mrb[0].mxu0
    %447 = vdwg.mxu0
    %448 = vmatprep.subr.mxu0 0.0
    %449 = vmatpush1.msra.mxu0 %v358
    %450 = vmatprep.subr.mxu0 0.0
    %451 = vmatpush1.msra.mxu0 %v359
    %452 = vmatprep.subr.mxu0 0.0
    %453 = vmatpush1.msra.mxu0 %v360
    %454 = vmatprep.subr.mxu0 0.0
    %455 = vmatpush1.msra.mxu0 %v361
    %456 = vmatprep.subr.mxu0 0.0
    %457 = vmatpush1.msra.mxu0 %v362
    %458 = vmatprep.subr.mxu0 0.0
    %459 = vmatpush1.msra.mxu0 %v363
    %460 = vmatprep.subr.mxu0 0.0
    %461 = vmatpush1.msra.mxu0 %v364
    %462 = vmatprep.subr.mxu0 0.0
    %463 = vmatpush1.msra.mxu0 %v365
    %464 = vmatprep.subr.mxu0 0.0
    %465 = vmatpush1.msra.mxu0 %v366
    %466 = vmatprep.subr.mxu0 0.0
    %467 = vmatpush1.msra.mxu0 %v367
    %468 = vmatprep.subr.mxu0 0.0
    %469 = vmatpush1.msra.mxu0 %v368
    %470 = vmatprep.subr.mxu0 0.0
    %471 = vmatpush1.msra.mxu0 %v369
    %472 = vmatprep.subr.mxu0 0.0
    %473 = vmatpush1.msra.mxu0 %v370
    %474 = vmatprep.subr.mxu0 0.0
    %475 = vmatpush1.msra.mxu0 %v371
    %476 = vmatprep.subr.mxu0 0.0
    %477 = vmatpush1.msra.mxu0 %v372
    %478 = vmatprep.subr.mxu0 0.0
    %479 = vmatpush1.msra.mxu0 %v373
    %480 = vmatprep.subr.mxu0 0.0
    %481 = vmatpush1.msra.mxu0 0.0
    %482 = vmatprep.subr.mxu0 0.0
    %483 = vmatpush1.msra.mxu0 0.0
    %484 = vmatprep.subr.mxu0 0.0
    %485 = vmatpush1.msra.mxu0 0.0
    %486 = vmatprep.subr.mxu0 0.0
    %487 = vmatpush1.msra.mxu0 0.0
    %488 = vmatprep.subr.mxu0 0.0
    %489 = vmatpush1.msra.mxu0 0.0
    %490 = vmatprep.subr.mxu0 0.0
    %491 = vmatpush1.msra.mxu0 0.0
    %492 = vmatprep.subr.mxu0 0.0
    %493 = vmatpush1.msra.mxu0 0.0
    %494 = vmatprep.subr.mxu0 0.0
    %495 = vmatpush1.msra.mxu0 0.0
    %496 = vmatprep.subr.mxu0 0.0
    %497 = vmatpush1.msra.mxu0 0.0
    %498 = vmatprep.subr.mxu0 0.0
    %499 = vmatpush1.msra.mxu0 0.0
    %500 = vmatprep.subr.mxu0 0.0
    %501 = vmatpush1.msra.mxu0 0.0
    %502 = vmatprep.subr.mxu0 0.0
    %503 = vmatpush1.msra.mxu0 0.0
    %504 = vmatprep.subr.mxu0 0.0
    %505 = vmatpush1.msra.mxu0 0.0
    %506 = vmatprep.subr.mxu0 0.0
    %507 = vmatpush1.msra.mxu0 0.0
    %508 = vmatprep.subr.mxu0 0.0
    %509 = vmatpush1.msra.mxu0 0.0
    %510 = vmatprep.subr.mxu0 0.0
    %511 = vmatpush1.msra.mxu0 0.0
    %512 = vmatprep.mubr.f32.mxu0 0.0
    %513 = vmatmul.mubr.f32.gmra.mrb[0].mxu0 %v357
    %v514 = vpop.f32.mrb[0].mxu0
    %v515 = vadd.f32 %v445, %v514
    %v516 = vpop.f32.mrb[0].mxu0
    %517 = vdwg.mxu0
    %v518 = vld [vmem:[%s4] sm:$0xff]
    %vm519 = vcmask 64512
    %v521 = vsel %vm519, %v25, 0
    %523 = vmatprep.subr.mxu0 0.0
    %524 = vmatpush1.msra.mxu0 %v518
    %525 = vmatprep.subr.mxu0 0.0
    %526 = vmatpush1.msra.mxu0 0.0
    %527 = vmatprep.subr.mxu0 0.0
    %528 = vmatpush1.msra.mxu0 0.0
    %529 = vmatprep.subr.mxu0 0.0
    %530 = vmatpush1.msra.mxu0 0.0
    %531 = vmatprep.subr.mxu0 0.0
    %532 = vmatpush1.msra.mxu0 0.0
    %533 = vmatprep.subr.mxu0 0.0
    %534 = vmatpush1.msra.mxu0 0.0
    %535 = vmatprep.subr.mxu0 0.0
    %536 = vmatpush1.msra.mxu0 0.0
    %537 = vmatprep.subr.mxu0 0.0
    %538 = vmatpush1.msra.mxu0 0.0
    %539 = vmatprep.subr.mxu0 0.0
    %540 = vmatpush1.msra.mxu0 0.0
    %541 = vmatprep.subr.mxu0 0.0
    %542 = vmatpush1.msra.mxu0 0.0
    %543 = vmatprep.subr.mxu0 0.0
    %544 = vmatpush1.msra.mxu0 0.0
    %545 = vmatprep.subr.mxu0 0.0
    %546 = vmatpush1.msra.mxu0 0.0
    %547 = vmatprep.subr.mxu0 0.0
    %548 = vmatpush1.msra.mxu0 0.0
    %549 = vmatprep.subr.mxu0 0.0
    %550 = vmatpush1.msra.mxu0 0.0
    %551 = vmatprep.subr.mxu0 0.0
    %552 = vmatpush1.msra.mxu0 0.0
    %553 = vmatprep.subr.mxu0 0.0
    %554 = vmatpush1.msra.mxu0 0.0
    %555 = vmatprep.subr.mxu0 0.0
    %556 = vmatpush1.msra.mxu0 0.0
    %557 = vmatprep.subr.mxu0 0.0
    %558 = vmatpush1.msra.mxu0 0.0
    %559 = vmatprep.subr.mxu0 0.0
    %560 = vmatpush1.msra.mxu0 0.0
    %561 = vmatprep.subr.mxu0 0.0
    %562 = vmatpush1.msra.mxu0 0.0
    %563 = vmatprep.subr.mxu0 0.0
    %564 = vmatpush1.msra.mxu0 0.0
    %565 = vmatprep.subr.mxu0 0.0
    %566 = vmatpush1.msra.mxu0 0.0
    %567 = vmatprep.subr.mxu0 0.0
    %568 = vmatpush1.msra.mxu0 0.0
    %569 = vmatprep.subr.mxu0 0.0
    %570 = vmatpush1.msra.mxu0 0.0
    %571 = vmatprep.subr.mxu0 0.0
    %572 = vmatpush1.msra.mxu0 0.0
    %573 = vmatprep.subr.mxu0 0.0
    %574 = vmatpush1.msra.mxu0 0.0
    %575 = vmatprep.subr.mxu0 0.0
    %576 = vmatpush1.msra.mxu0 0.0
    %577 = vmatprep.subr.mxu0 0.0
    %578 = vmatpush1.msra.mxu0 0.0
    %579 = vmatprep.subr.mxu0 0.0
    %580 = vmatpush1.msra.mxu0 0.0
    %581 = vmatprep.subr.mxu0 0.0
    %582 = vmatpush1.msra.mxu0 0.0
    %583 = vmatprep.subr.mxu0 0.0
    %584 = vmatpush1.msra.mxu0 0.0
    %585 = vmatprep.subr.mxu0 0.0
    %586 = vmatpush1.msra.mxu0 0.0
    %587 = vmatprep.mubr.f32.mxu0 0.0
    %588 = vmatmul.mubr.f32.gmra.mrb[0].mxu0 %v521
    %v589 = vpop.f32.mrb[0].mxu0
    %v590 = vadd.f32 0.0, %v589
    %v591 = vpop.f32.mrb[0].mxu0
    %592 = vdwg.mxu0
    %v593 = vadd.f32 %v515, %v590
    %v594 = vld [vmem:[%s5] sm:$0x1]
    %v596 = vlaneseq
    %v597 = vshrl.u32 %v596, 7
    %v598 = vsub.s32 0, %v597
    %v599 = vrot.slane %v594, %v598
    %v601 = vadd.f32 %v593, %v599
    %v602 = vtanh.pop %v601
    %603 = vst.msk [vmem:[#allocation2] sm:$0xff] %vm346, %v602
    // Predicated region
    $region26: #{tpu_custom_call.1} parent=1 // pred_check
      _
    $region27: #{tpu_custom_call.1} parent=1 // pred_check_branch
      %605 = sbr.rel (0) target = $region29
    $region28: #{tpu_custom_call.1} parent=1 // pred_region
      %s607 = ssub.s32 128, 128
      %608 = vsyncadd [#allocation3], %s607
      %s610 = sshll.u32 [#allocation2], 4
      %s611 = int_to_ptr.vmem [resolvable:$true] %s610
      %613 = dma.vmem_to_hbm [thread:$0]  %s611, 128, %s6, [#allocation3]
    $region29: #{tpu_custom_call.1} parent=1 // pred_fallthru
      _
    // Predicated region
    $region30: #{tpu_custom_call.1} parent=1 // pred_check
      _
    $region31: #{tpu_custom_call.1} parent=1 // pred_check_branch
      %615 = sbr.rel (0) target = $region33
    $region32: #{tpu_custom_call.1} parent=1 // pred_region
      %616 = dma.done [#allocation3], 128
    $region33: #{tpu_custom_call.1} parent=1 // pred_fallthru
      _
    %617 = vsyncpa [#allocation3], 1

</llo_original>
